<compile_context>
chip_gen: v7x
topology: tpu7x:2x2x1
jax: 0.10.0
libtpu: 0.0.40
codegen_flags: <defaults>
</compile_context>

<pallas_src>
import functools

import jax
import jax.numpy as jnp
from jax.experimental import pallas as pl
from jax.experimental.pallas import tpu as pltpu


# ----------------------------------------------------------------------------- helpers
def _round_up(x, m):
    return ((x + m - 1) // m) * m


def _pad2(a, rows, cols):
    return jnp.pad(a, ((0, rows - a.shape[0]), (0, cols - a.shape[1])))


def _hw_config():
    """Per-generation tile size / scoped-VMEM limit."""
    vmem_cap = 128 << 20
    try:
        vmem_cap = getattr(pltpu.get_tpu_info(), "vmem_capacity_bytes", vmem_cap)
    except Exception:
        pass
    if vmem_cap <= (64 << 20):
        # v7x-class: 64 MiB physical VMEM per TensorCore -> keep scoped limit well under.
        return {"tile": 512, "vmem_limit": 40 << 20}
    # v5e / v6e: 128 MiB VMEM; 1024 is a multiple of 256 (v6e MXU) and 128 (v5e MXU) and
    # amortizes the ~0.35 us per-grid-step overhead better on the mem-bound adj stream.
    return {"tile": 1024, "vmem_limit": 64 << 20}


# ----------------------------------------------------------------------------- kernels
def _linear_bias_kernel(x_ref, w_ref, b_ref, out_ref):
    """out = x @ w + b  (one row tile per grid step; f32 accumulate, store in op dtype)."""
    y = jnp.dot(x_ref[...], w_ref[...], preferred_element_type=jnp.float32) + b_ref[...]
    out_ref[...] = y.astype(out_ref.dtype)


def _agg_relu_linear_kernel(adj_ref, h_ref, w2_ref, b2_ref, out_ref, acc_ref):
    """out = relu(adj @ h) @ w2 + b2, with adj/h streamed over k-tiles."""
    k = pl.program_id(1)

    @pl.when(k == 0)
    def _():
        acc_ref[...] = jnp.zeros_like(acc_ref)

    acc_ref[...] += jnp.dot(adj_ref[...], h_ref[...],
                            preferred_element_type=jnp.float32)

    @pl.when(k == pl.num_programs(1) - 1)
    def _():
        h1 = jnp.maximum(acc_ref[...], 0.0)          # relu (applied once; idempotent)
        z = jnp.dot(h1.astype(w2_ref.dtype), w2_ref[...],
                    preferred_element_type=jnp.float32) + b2_ref[...]
        out_ref[...] = z.astype(out_ref.dtype)


def _agg_logsoftmax_kernel(adj_ref, z_ref, out_ref, acc_ref, *, nclass):
    """out = log_softmax(adj @ z) with padded class lanes masked out of the reduction."""
    k = pl.program_id(1)

    @pl.when(k == 0)
    def _():
        acc_ref[...] = jnp.zeros_like(acc_ref)

    acc_ref[...] += jnp.dot(adj_ref[...], z_ref[...],
                            preferred_element_type=jnp.float32)

    @pl.when(k == pl.num_programs(1) - 1)
    def _():
        logits = acc_ref[...]
        col = jax.lax.broadcasted_iota(jnp.int32, logits.shape, 1)
        logits = jnp.where(col < nclass, logits, -1e30)   # mask padded class lanes
        m = jnp.max(logits, axis=1, keepdims=True)
        zc = logits - m
        lse = jnp.log(jnp.sum(jnp.exp(zc), axis=1, keepdims=True))
        out_ref[...] = (zc - lse).astype(out_ref.dtype)


# ----------------------------------------------------------------------------- wrapper
def gcn_net_forward(adj, x, w1, b1, w2, b2, *, use_bf16=True):
    """adj: (N, N) normalized adjacency; x: (N, nfeat); w1: (nhid, nfeat); b1: (nhid,);
    w2: (nclass, nhid); b2: (nclass,). Returns (N, nclass) log-probs."""
    N, nfeat = x.shape
    nhid = w1.shape[0]
    nclass = w2.shape[0]

    cfg = _hw_config()
    lane = 128

    # Lane-dense padding of the narrow feature dims; row padding of N to the tile size.
    nfeat_p = _round_up(nfeat, lane)
    nhid_p = _round_up(nhid, lane)
    nclass_p = _round_up(nclass, lane)
    tile = min(cfg["tile"], _round_up(N, lane))
    n_pad = _round_up(N, tile)

    op_dtype = jnp.bfloat16 if use_bf16 else jnp.float32
    itemsize = 2 if use_bf16 else 4

    adj_p = _pad2(jnp.asarray(adj, jnp.float32), n_pad, n_pad).astype(op_dtype)
    x_p = _pad2(jnp.asarray(x, jnp.float32), n_pad, nfeat_p).astype(op_dtype)
    w1t_p = _pad2(jnp.asarray(w1, jnp.float32).T, nfeat_p, nhid_p).astype(op_dtype)
    w2t_p = _pad2(jnp.asarray(w2, jnp.float32).T, nhid_p, nclass_p).astype(op_dtype)
    b1_p = _pad2(jnp.asarray(b1, jnp.float32).reshape(1, -1), 1, nhid_p)
    b2_p = _pad2(jnp.asarray(b2, jnp.float32).reshape(1, -1), 1, nclass_p)

    params = lambda sem: pltpu.CompilerParams(
        dimension_semantics=sem, vmem_limit_bytes=cfg["vmem_limit"])

    # ---- stage 1: per-node linear  h_lin = x @ W1^T + b1 -------------------------------
    h_lin = pl.pallas_call(
        _linear_bias_kernel,
        out_shape=jax.ShapeDtypeStruct((n_pad, nhid_p), op_dtype),
        grid_spec=pltpu.PrefetchScalarGridSpec(
            num_scalar_prefetch=0,
            grid=(n_pad // tile,),
            in_specs=[
                pl.BlockSpec((tile, nfeat_p), lambda i: (i, 0)),
                pl.BlockSpec((nfeat_p, nhid_p), lambda i: (0, 0)),
                pl.BlockSpec((1, nhid_p), lambda i: (0, 0)),
            ],
            out_specs=pl.BlockSpec((tile, nhid_p), lambda i: (i, 0)),
        ),
        compiler_params=params(("parallel",)),
        cost_estimate=pl.CostEstimate(
            flops=2 * n_pad * nfeat_p * nhid_p,
            transcendentals=0,
            bytes_accessed=(n_pad * nfeat_p + nfeat_p * nhid_p + n_pad * nhid_p) * itemsize
            + nhid_p * 4,
        ),
    )(x_p, w1t_p, b1_p)

    # ---- stage 2: conv1 aggregation + relu, fused with the conv2 linear ----------------
    #   z_pre = relu(A_hat @ h_lin) @ W2^T + b2
    grid2 = (n_pad // tile, n_pad // tile)
    z_pre = pl.pallas_call(
        _agg_relu_linear_kernel,
        out_shape=jax.ShapeDtypeStruct((n_pad, nclass_p), op_dtype),
        grid_spec=pltpu.PrefetchScalarGridSpec(
            num_scalar_prefetch=0,
            grid=grid2,
            in_specs=[
                pl.BlockSpec((tile, tile), lambda i, k: (i, k)),
                pl.BlockSpec((tile, nhid_p), lambda i, k: (k, 0)),
                pl.BlockSpec((nhid_p, nclass_p), lambda i, k: (0, 0)),
                pl.BlockSpec((1, nclass_p), lambda i, k: (0, 0)),
            ],
            out_specs=pl.BlockSpec((tile, nclass_p), lambda i, k: (i, 0)),
            scratch_shapes=[pltpu.VMEM((tile, nhid_p), jnp.float32)],
        ),
        compiler_params=params(("parallel", "arbitrary")),
        cost_estimate=pl.CostEstimate(
            flops=2 * n_pad * n_pad * nhid_p + 2 * n_pad * nhid_p * nclass_p,
            transcendentals=0,
            bytes_accessed=(n_pad * n_pad + n_pad * nhid_p + nhid_p * nclass_p
                            + n_pad * nclass_p) * itemsize + nclass_p * 4,
        ),
    )(adj_p, h_lin, w2t_p, b2_p)

    # ---- stage 3: conv2 aggregation + masked log_softmax -------------------------------
    out_pad = pl.pallas_call(
        functools.partial(_agg_logsoftmax_kernel, nclass=nclass),
        out_shape=jax.ShapeDtypeStruct((n_pad, nclass_p), jnp.float32),
        grid_spec=pltpu.PrefetchScalarGridSpec(
            num_scalar_prefetch=0,
            grid=grid2,
            in_specs=[
                pl.BlockSpec((tile, tile), lambda i, k: (i, k)),
                pl.BlockSpec((tile, nclass_p), lambda i, k: (k, 0)),
            ],
            out_specs=pl.BlockSpec((tile, nclass_p), lambda i, k: (i, 0)),
            scratch_shapes=[pltpu.VMEM((tile, nclass_p), jnp.float32)],
        ),
        compiler_params=params(("parallel", "arbitrary")),
        cost_estimate=pl.CostEstimate(
            flops=2 * n_pad * n_pad * nclass_p,
            transcendentals=n_pad * (nclass_p + 1),
            bytes_accessed=(n_pad * n_pad + n_pad * nclass_p) * itemsize
            + n_pad * nclass_p * 4,
        ),
    )(adj_p, z_pre)

    # Reference returns log_softmax(...)[:num_nodes]; also drop padded class lanes.
    return out_pad[:N, :nclass]


def build_norm_adj(edge_index, num_nodes):
    """Dense A_hat matching GraphConvolution: add self loops; deg over row;
    norm = deg^-1/2[row] * deg^-1/2[col]; 'add' aggregation of x[row] at col."""
    # TODO(synk): for Reddit-scale graphs the dense O(N^2) A_hat must be replaced by a CSR
    # SpMM kernel (PrefetchScalarGridSpec row pointers driving DMA gathers); out of scope here.
    src, dst = edge_index[0], edge_index[1]
    loop = jnp.arange(num_nodes, dtype=src.dtype)
    row = jnp.concatenate([src, loop])
    col = jnp.concatenate([dst, loop])
    deg = jnp.zeros((num_nodes,), jnp.float32).at[row].add(1.0)
    dinv = jnp.where(deg > 0, deg ** -0.5, 0.0)
    norm = dinv[row] * dinv[col]
    adj = jnp.zeros((num_nodes, num_nodes), jnp.float32).at[col, row].add(norm)
    return adj


if __name__ == "__main__":
    # Small synthetic problem consistent with the module's forward.
    N_NODES, NFEAT, NHID, NCLASS, N_EDGES = 64, 32, 16, 8, 256

    key = jax.random.PRNGKey(0)
    k_x, k_e1, k_e2, k_w1, k_b1, k_w2, k_b2 = jax.random.split(key, 7)

    x = jax.random.normal(k_x, (N_NODES, NFEAT), jnp.float32)
    edge_index = jnp.stack([
        jax.random.randint(k_e1, (N_EDGES,), 0, N_NODES),
        jax.random.randint(k_e2, (N_EDGES,), 0, N_NODES),
    ]).astype(jnp.int32)

    # Deterministic parameter init (torch.nn.Linear-style uniform bounds).
    bound1 = 1.0 / (NFEAT ** 0.5)
    bound2 = 1.0 / (NHID ** 0.5)
    w1 = jax.random.uniform(k_w1, (NHID, NFEAT), jnp.float32, -bound1, bound1)
    b1 = jax.random.uniform(k_b1, (NHID,), jnp.float32, -bound1, bound1)
    w2 = jax.random.uniform(k_w2, (NCLASS, NHID), jnp.float32, -bound2, bound2)
    b2 = jax.random.uniform(k_b2, (NCLASS,), jnp.float32, -bound2, bound2)

    adj = build_norm_adj(edge_index, N_NODES)

    # TODO(synk): F.dropout (training-only) and the torch.distributed isend/irecv halo
    # feature exchange have no single-device Pallas equivalent; eval-mode single-partition
    # semantics are implemented.

    # --- f32 path: check against the plain-JAX reference --------------------------------
    out_f32 = gcn_net_forward(adj, x, w1, b1, w2, b2, use_bf16=False)
    jax.block_until_ready(out_f32)
    h_ref = jnp.maximum(adj @ (x @ w1.T + b1), 0.0)
    z_ref = adj @ (h_ref @ w2.T + b2)
    ref_f32 = jax.nn.log_softmax(z_ref, axis=1)
    assert jnp.allclose(out_f32, ref_f32, atol=1e-3, rtol=1e-3), "f32 mismatch vs JAX reference"

    # --- bf16 path (default perf config): check against a bf16-mirrored reference -------
    out_bf16 = gcn_net_forward(adj, x, w1, b1, w2, b2, use_bf16=True)
    jax.block_until_ready(out_bf16)
    bf = jnp.bfloat16
    bdot = lambda a, b: jnp.dot(a.astype(bf), b.astype(bf),
                                preferred_element_type=jnp.float32)
    h_lin_r = (bdot(x, w1.T) + b1).astype(bf)
    h1_r = jnp.maximum(bdot(adj, h_lin_r), 0.0)
    z_pre_r = (bdot(h1_r, w2.T) + b2).astype(bf)
    ref_bf16 = jax.nn.log_softmax(bdot(adj, z_pre_r), axis=1)
    assert jnp.allclose(out_bf16, ref_bf16, atol=1e-2, rtol=1e-2), \
        "bf16 mismatch vs mirrored reference"

    print("KERNEL_OK")
</pallas_src>

<mosaic_0001>
module attributes {stable_mosaic.version = 11 : i64} {
  func.func @_linear_bias_kernel(%arg0: i32, %arg1: memref<128x128xf32, #tpu.memory_space<vmem>>, %arg2: memref<128x128xf32, #tpu.memory_space<vmem>>, %arg3: memref<1x128xf32, #tpu.memory_space<vmem>>, %arg4: memref<128x128xf32, #tpu.memory_space<vmem>>) attributes {dimension_semantics = [#tpu.dimension_semantics<parallel>], iteration_bounds = array<i64: 1>, scalar_prefetch = 0 : i64, scratch_operands = 0 : i64, tpu.core_type = #tpu.core_type<tc>, window_params = [{transform_indices = @transform_0, window_bounds = array<i64: 128, 128>}, {pipeline_mode = #tpu.pipeline_mode<synchronous>, transform_indices = @transform_1, window_bounds = array<i64: 128, 128>}, {pipeline_mode = #tpu.pipeline_mode<synchronous>, transform_indices = @transform_2, window_bounds = array<i64: 1, 128>}, {transform_indices = @transform_3, window_bounds = array<i64: 128, 128>}]} {
    %c0 = arith.constant 0 : index
    %c0_0 = arith.constant 0 : index
    %0 = vector.load %arg1[%c0, %c0_0] : memref<128x128xf32, #tpu.memory_space<vmem>>, vector<128x128xf32>
    %c0_1 = arith.constant 0 : index
    %c0_2 = arith.constant 0 : index
    %1 = vector.load %arg2[%c0_1, %c0_2] : memref<128x128xf32, #tpu.memory_space<vmem>>, vector<128x128xf32>
    %cst = arith.constant dense<0.000000e+00> : vector<128x128xf32>
    %2 = tpu.matmul %0, %1, %cst {dimension_numbers = #tpu.dot_dimension_numbers<[1], [0], [0], [1], [0, 0, 1, 1], [], []>} : vector<128x128xf32>, vector<128x128xf32>, vector<128x128xf32> -> vector<128x128xf32>
    %c0_3 = arith.constant 0 : index
    %c0_4 = arith.constant 0 : index
    %3 = vector.load %arg3[%c0_3, %c0_4] : memref<1x128xf32, #tpu.memory_space<vmem>>, vector<1x128xf32>
    %4 = vector.broadcast %3 : vector<1x128xf32> to vector<128x128xf32>
    %5 = arith.addf %2, %4 : vector<128x128xf32>
    %c0_5 = arith.constant 0 : index
    %c0_6 = arith.constant 0 : index
    %6 = vector.load %arg4[%c0_5, %c0_6] : memref<128x128xf32, #tpu.memory_space<vmem>>, vector<128x128xf32>
    tpu.vector_store %arg4[%c0_5, %c0_6], %5 {strides = array<i32>} : memref<128x128xf32, #tpu.memory_space<vmem>>, vector<128x128xf32>,
    return
  }
  func.func @transform_0(%arg0: i32) -> (i32, i32) {
    %c0_i32 = arith.constant 0 : i32
    %c0_i32_0 = arith.constant 0 : i32
    return %arg0, %c0_i32 : i32, i32
  }
  func.func @transform_1(%arg0: i32) -> (i32, i32) {
    %c0_i32 = arith.constant 0 : i32
    %c0_i32_0 = arith.constant 0 : i32
    %c0_i32_1 = arith.constant 0 : i32
    return %c0_i32, %c0_i32_0 : i32, i32
  }
  func.func @transform_2(%arg0: i32) -> (i32, i32) {
    %c0_i32 = arith.constant 0 : i32
    %c0_i32_0 = arith.constant 0 : i32
    %c0_i32_1 = arith.constant 0 : i32
    return %c0_i32, %c0_i32_0 : i32, i32
  }
  func.func @transform_3(%arg0: i32) -> (i32, i32) {
    %c0_i32 = arith.constant 0 : i32
    %c0_i32_0 = arith.constant 0 : i32
    return %arg0, %c0_i32 : i32, i32
  }
}

</mosaic_0001>

<llo_original>
// kernel: tpu_custom_call.1
$region0: #{tpu_custom_call.1}
  #allocation0 [shape = 'u32[]', space=smem, size = 0x4, offset = 0x4, fixed_abs, tag = 'smem constant byte address 0x4 - core index']
  #allocation1 [shape = 'u32[144,128]{1,0:T(1,128)}', space=vmem, size = 0x12000, scoped, tag = 'internal scratch']
  %s0 = inlined_call_operand.hbm [shape: f32[128,128], index: 0, kind: input, shape index: {}]
  %s1 = inlined_call_operand.hbm [shape: f32[128,128], index: 1, kind: input, shape index: {}]
  %s2 = inlined_call_operand.hbm [shape: f32[1,128], index: 2, kind: input, shape index: {}]
  %s3 = inlined_call_operand.hbm [shape: f32[128,128], index: 3, kind: output, shape index: {}]
  %s4 = sld [smem:[#allocation0]]
  $region34: #{tpu_custom_call.1} parent=0
    _
  %s6 = ssub.s32 1, %s4
  %s7 = scalar_select 0, %s6, %s4
  $region1: #{tpu_custom_call.1} parent=0
    #allocation2 [shape = 'u8[65536]{0}', space=vmem, size = 0x10000, scoped, tag = 'input window, operand 0, single buffered']
    #allocation3 [shape = 's32[1]{0}', space=sflag, size = 0x4, scoped, tag = 'scoped memory for tpu_custom_call.1']
    #allocation4 [shape = 's32[1]{0}', space=sflag, size = 0x4, scoped, tag = 'scoped memory for tpu_custom_call.1']
    #allocation5 [shape = 'u8[65536]{0}', space=vmem, size = 0x10000, scoped, tag = 'input window, operand 1, single buffered']
    #allocation6 [shape = 's32[1]{0}', space=sflag, size = 0x4, scoped, tag = 'scoped memory for tpu_custom_call.1']
    #allocation7 [shape = 'u8[512]{0}', space=vmem, size = 0x400, scoped, tag = 'input window, operand 2, single buffered']
    #allocation8 [shape = 'u8[65536]{0}', space=vmem, size = 0x10000, scoped, tag = 'output window, operand 0, single buffered']
    %8 = vsyncpa [#allocation3], 0
    %9 = vsyncpa [#allocation6], 0
    %10 = vsyncpa [#allocation4], 0
    // Predicated region
    $region2: #{tpu_custom_call.1} parent=1 // pred_check
      _
    $region3: #{tpu_custom_call.1} parent=1 // pred_check_branch
      %12 = sbr.rel (0) target = $region5
    $region4: #{tpu_custom_call.1} parent=1 // pred_region
      %s14 = ssub.s32 2048, 2048
      %15 = vsyncadd [#allocation3], %s14
      %s16 = sshll.u32 [#allocation2], 4
      %s17 = int_to_ptr.vmem [resolvable:$true] %s16
      %22 = dma.hbm_to_vmem [thread:$0]  %s0, 2048, %s17, [#allocation3], 128, 128, 8
    $region5: #{tpu_custom_call.1} parent=1 // pred_fallthru
      _
    // Predicated region
    $region6: #{tpu_custom_call.1} parent=1 // pred_check
      _
    $region7: #{tpu_custom_call.1} parent=1 // pred_check_branch
      %24 = sbr.rel (0) target = $region9
    $region8: #{tpu_custom_call.1} parent=1 // pred_region
      %s26 = ssub.s32 2048, 2048
      %27 = vsyncadd [#allocation6], %s26
      %s28 = sshll.u32 [#allocation5], 4
      %s29 = int_to_ptr.vmem [resolvable:$true] %s28
      %34 = dma.hbm_to_vmem [thread:$0]  %s1, 2048, %s29, [#allocation6], 128, 128, 8
    $region9: #{tpu_custom_call.1} parent=1 // pred_fallthru
      _
    // Predicated region
    $region10: #{tpu_custom_call.1} parent=1 // pred_check
      _
    $region11: #{tpu_custom_call.1} parent=1 // pred_check_branch
      %36 = sbr.rel (0) target = $region13
    $region12: #{tpu_custom_call.1} parent=1 // pred_region
      %s38 = ssub.s32 16, 16
      %39 = vsyncadd [#allocation6], %s38
      %s41 = sshll.u32 [#allocation7], 4
      %s42 = int_to_ptr.vmem [resolvable:$true] %s41
      %44 = dma.hbm_to_vmem [thread:$0]  %s2, 16, %s42, [#allocation6]
    $region13: #{tpu_custom_call.1} parent=1 // pred_fallthru
      _
    // Predicated region
    $region14: #{tpu_custom_call.1} parent=1 // pred_check
      _
    $region15: #{tpu_custom_call.1} parent=1 // pred_check_branch
      %46 = sbr.rel (0) target = $region17
    $region16: #{tpu_custom_call.1} parent=1 // pred_region
      %47 = dma.done [#allocation3], 2048
    $region17: #{tpu_custom_call.1} parent=1 // pred_fallthru
      _
    // Predicated region
    $region18: #{tpu_custom_call.1} parent=1 // pred_check
      _
    $region19: #{tpu_custom_call.1} parent=1 // pred_check_branch
      %49 = sbr.rel (0) target = $region21
    $region20: #{tpu_custom_call.1} parent=1 // pred_region
      %50 = dma.done [#allocation6], 2048
    $region21: #{tpu_custom_call.1} parent=1 // pred_fallthru
      _
    // Predicated region
    $region22: #{tpu_custom_call.1} parent=1 // pred_check
      _
    $region23: #{tpu_custom_call.1} parent=1 // pred_check_branch
      %52 = sbr.rel (0) target = $region25
    $region24: #{tpu_custom_call.1} parent=1 // pred_region
      %53 = dma.done [#allocation6], 16
    $region25: #{tpu_custom_call.1} parent=1 // pred_fallthru
      _
    %v54 = vld [vmem:[#allocation2] sm:$0xff]
    %v55 = vld [vmem:[#allocation2 + $0x8] sm:$0xff]
    %v56 = vld [vmem:[#allocation2 + $0x10] sm:$0xff]
    %v57 = vld [vmem:[#allocation2 + $0x18] sm:$0xff]
    %v58 = vld [vmem:[#allocation2 + $0x20] sm:$0xff]
    %v59 = vld [vmem:[#allocation2 + $0x28] sm:$0xff]
    %v60 = vld [vmem:[#allocation2 + $0x30] sm:$0xff]
    %v61 = vld [vmem:[#allocation2 + $0x38] sm:$0xff]
    %v62 = vld [vmem:[#allocation2 + $0x40] sm:$0xff]
    %v63 = vld [vmem:[#allocation2 + $0x48] sm:$0xff]
    %v64 = vld [vmem:[#allocation2 + $0x50] sm:$0xff]
    %v65 = vld [vmem:[#allocation2 + $0x58] sm:$0xff]
    %v66 = vld [vmem:[#allocation2 + $0x60] sm:$0xff]
    %v67 = vld [vmem:[#allocation2 + $0x68] sm:$0xff]
    %v68 = vld [vmem:[#allocation2 + $0x70] sm:$0xff]
    %v69 = vld [vmem:[#allocation2 + $0x78] sm:$0xff]
    %v70 = vld [vmem:[#allocation5] sm:$0xff]
    %v71 = vld [vmem:[#allocation5 + $0x8] sm:$0xff]
    %v72 = vld [vmem:[#allocation5 + $0x10] sm:$0xff]
    %v73 = vld [vmem:[#allocation5 + $0x18] sm:$0xff]
    %v74 = vld [vmem:[#allocation5 + $0x20] sm:$0xff]
    %v75 = vld [vmem:[#allocation5 + $0x28] sm:$0xff]
    %v76 = vld [vmem:[#allocation5 + $0x30] sm:$0xff]
    %v77 = vld [vmem:[#allocation5 + $0x38] sm:$0xff]
    %v78 = vld [vmem:[#allocation5 + $0x40] sm:$0xff]
    %v79 = vld [vmem:[#allocation5 + $0x48] sm:$0xff]
    %v80 = vld [vmem:[#allocation5 + $0x50] sm:$0xff]
    %v81 = vld [vmem:[#allocation5 + $0x58] sm:$0xff]
    %v82 = vld [vmem:[#allocation5 + $0x60] sm:$0xff]
    %v83 = vld [vmem:[#allocation5 + $0x68] sm:$0xff]
    %v84 = vld [vmem:[#allocation5 + $0x70] sm:$0xff]
    %v85 = vld [vmem:[#allocation5 + $0x78] sm:$0xff]
    %v86 = vld [vmem:[#allocation7] sm:$0x1]
    %v88 = vlaneseq
    %v89 = vshrl.u32 %v88, 7
    %v90 = vsub.s32 0, %v89
    %v91 = vrot.slane %v86, %v90
    %93 = vmatprep.subr.mxu0 0.0
    %94 = vmatpush1.msra.mxu0 %v70
    %95 = vmatprep.subr.mxu0 0.0
    %96 = vmatpush1.msra.mxu0 %v71
    %97 = vmatprep.subr.mxu0 0.0
    %98 = vmatpush1.msra.mxu0 %v72
    %99 = vmatprep.subr.mxu0 0.0
    %100 = vmatpush1.msra.mxu0 %v73
    %101 = vmatprep.subr.mxu0 0.0
    %102 = vmatpush1.msra.mxu0 %v74
    %103 = vmatprep.subr.mxu0 0.0
    %104 = vmatpush1.msra.mxu0 %v75
    %105 = vmatprep.subr.mxu0 0.0
    %106 = vmatpush1.msra.mxu0 %v76
    %107 = vmatprep.subr.mxu0 0.0
    %108 = vmatpush1.msra.mxu0 %v77
    %109 = vmatprep.subr.mxu0 0.0
    %110 = vmatpush1.msra.mxu0 %v78
    %111 = vmatprep.subr.mxu0 0.0
    %112 = vmatpush1.msra.mxu0 %v79
    %113 = vmatprep.subr.mxu0 0.0
    %114 = vmatpush1.msra.mxu0 %v80
    %115 = vmatprep.subr.mxu0 0.0
    %116 = vmatpush1.msra.mxu0 %v81
    %117 = vmatprep.subr.mxu0 0.0
    %118 = vmatpush1.msra.mxu0 %v82
    %119 = vmatprep.subr.mxu0 0.0
    %120 = vmatpush1.msra.mxu0 %v83
    %121 = vmatprep.subr.mxu0 0.0
    %122 = vmatpush1.msra.mxu0 %v84
    %123 = vmatprep.subr.mxu0 0.0
    %124 = vmatpush1.msra.mxu0 %v85
    %125 = vmatprep.subr.mxu0 0.0
    %126 = vmatpush1.msra.mxu0 0.0
    %127 = vmatprep.subr.mxu0 0.0
    %128 = vmatpush1.msra.mxu0 0.0
    %129 = vmatprep.subr.mxu0 0.0
    %130 = vmatpush1.msra.mxu0 0.0
    %131 = vmatprep.subr.mxu0 0.0
    %132 = vmatpush1.msra.mxu0 0.0
    %133 = vmatprep.subr.mxu0 0.0
    %134 = vmatpush1.msra.mxu0 0.0
    %135 = vmatprep.subr.mxu0 0.0
    %136 = vmatpush1.msra.mxu0 0.0
    %137 = vmatprep.subr.mxu0 0.0
    %138 = vmatpush1.msra.mxu0 0.0
    %139 = vmatprep.subr.mxu0 0.0
    %140 = vmatpush1.msra.mxu0 0.0
    %141 = vmatprep.subr.mxu0 0.0
    %142 = vmatpush1.msra.mxu0 0.0
    %143 = vmatprep.subr.mxu0 0.0
    %144 = vmatpush1.msra.mxu0 0.0
    %145 = vmatprep.subr.mxu0 0.0
    %146 = vmatpush1.msra.mxu0 0.0
    %147 = vmatprep.subr.mxu0 0.0
    %148 = vmatpush1.msra.mxu0 0.0
    %149 = vmatprep.subr.mxu0 0.0
    %150 = vmatpush1.msra.mxu0 0.0
    %151 = vmatprep.subr.mxu0 0.0
    %152 = vmatpush1.msra.mxu0 0.0
    %153 = vmatprep.subr.mxu0 0.0
    %154 = vmatpush1.msra.mxu0 0.0
    %155 = vmatprep.subr.mxu0 0.0
    %156 = vmatpush1.msra.mxu0 0.0
    %157 = vmatprep.mubr.f32.mxu0 0.0
    %158 = vmatmul.mubr.f32.gmra.mrb[0].mxu0 %v54
    %v159 = vpop.f32.mrb[0].mxu0
    %v160 = vadd.f32 %v91, %v159
    %v161 = vpop.f32.mrb[0].mxu0
    %162 = vmatprep.mubr.f32.mxu0 0.0
    %163 = vmatmul.mubr.f32.gmra.mrb[0].mxu0 %v55
    %v164 = vpop.f32.mrb[0].mxu0
    %v165 = vadd.f32 %v91, %v164
    %v166 = vpop.f32.mrb[0].mxu0
    %167 = vmatprep.mubr.f32.mxu0 0.0
    %168 = vmatmul.mubr.f32.gmra.mrb[0].mxu0 %v56
    %v169 = vpop.f32.mrb[0].mxu0
    %v170 = vadd.f32 %v91, %v169
    %v171 = vpop.f32.mrb[0].mxu0
    %172 = vmatprep.mubr.f32.mxu0 0.0
    %173 = vmatmul.mubr.f32.gmra.mrb[0].mxu0 %v57
    %v174 = vpop.f32.mrb[0].mxu0
    %v175 = vadd.f32 %v91, %v174
    %v176 = vpop.f32.mrb[0].mxu0
    %177 = vmatprep.mubr.f32.mxu0 0.0
    %178 = vmatmul.mubr.f32.gmra.mrb[0].mxu0 %v58
    %v179 = vpop.f32.mrb[0].mxu0
    %v180 = vadd.f32 %v91, %v179
    %v181 = vpop.f32.mrb[0].mxu0
    %182 = vmatprep.mubr.f32.mxu0 0.0
    %183 = vmatmul.mubr.f32.gmra.mrb[0].mxu0 %v59
    %v184 = vpop.f32.mrb[0].mxu0
    %v185 = vadd.f32 %v91, %v184
    %v186 = vpop.f32.mrb[0].mxu0
    %187 = vmatprep.mubr.f32.mxu0 0.0
    %188 = vmatmul.mubr.f32.gmra.mrb[0].mxu0 %v60
    %v189 = vpop.f32.mrb[0].mxu0
    %v190 = vadd.f32 %v91, %v189
    %v191 = vpop.f32.mrb[0].mxu0
    %192 = vmatprep.mubr.f32.mxu0 0.0
    %193 = vmatmul.mubr.f32.gmra.mrb[0].mxu0 %v61
    %v194 = vpop.f32.mrb[0].mxu0
    %v195 = vadd.f32 %v91, %v194
    %v196 = vpop.f32.mrb[0].mxu0
    %197 = vmatprep.mubr.f32.mxu0 0.0
    %198 = vmatmul.mubr.f32.gmra.mrb[0].mxu0 %v62
    %v199 = vpop.f32.mrb[0].mxu0
    %v200 = vadd.f32 %v91, %v199
    %v201 = vpop.f32.mrb[0].mxu0
    %202 = vmatprep.mubr.f32.mxu0 0.0
    %203 = vmatmul.mubr.f32.gmra.mrb[0].mxu0 %v63
    %v204 = vpop.f32.mrb[0].mxu0
    %v205 = vadd.f32 %v91, %v204
    %v206 = vpop.f32.mrb[0].mxu0
    %207 = vmatprep.mubr.f32.mxu0 0.0
    %208 = vmatmul.mubr.f32.gmra.mrb[0].mxu0 %v64
    %v209 = vpop.f32.mrb[0].mxu0
    %v210 = vadd.f32 %v91, %v209
    %v211 = vpop.f32.mrb[0].mxu0
    %212 = vmatprep.mubr.f32.mxu0 0.0
    %213 = vmatmul.mubr.f32.gmra.mrb[0].mxu0 %v65
    %v214 = vpop.f32.mrb[0].mxu0
    %v215 = vadd.f32 %v91, %v214
    %v216 = vpop.f32.mrb[0].mxu0
    %217 = vmatprep.mubr.f32.mxu0 0.0
    %218 = vmatmul.mubr.f32.gmra.mrb[0].mxu0 %v66
    %v219 = vpop.f32.mrb[0].mxu0
    %v220 = vadd.f32 %v91, %v219
    %v221 = vpop.f32.mrb[0].mxu0
    %222 = vmatprep.mubr.f32.mxu0 0.0
    %223 = vmatmul.mubr.f32.gmra.mrb[0].mxu0 %v67
    %v224 = vpop.f32.mrb[0].mxu0
    %v225 = vadd.f32 %v91, %v224
    %v226 = vpop.f32.mrb[0].mxu0
    %227 = vmatprep.mubr.f32.mxu0 0.0
    %228 = vmatmul.mubr.f32.gmra.mrb[0].mxu0 %v68
    %v229 = vpop.f32.mrb[0].mxu0
    %v230 = vadd.f32 %v91, %v229
    %v231 = vpop.f32.mrb[0].mxu0
    %232 = vmatprep.mubr.f32.mxu0 0.0
    %233 = vmatmul.mubr.f32.gmra.mrb[0].mxu0 %v69
    %v234 = vpop.f32.mrb[0].mxu0
    %v235 = vadd.f32 %v91, %v234
    %v236 = vpop.f32.mrb[0].mxu0
    %237 = vdwg.mxu0
    %238 = vst [vmem:[#allocation8] sm:$0xff] %v160
    %239 = vst [vmem:[#allocation8 + $0x8] sm:$0xff] %v165
    %240 = vst [vmem:[#allocation8 + $0x10] sm:$0xff] %v170
    %241 = vst [vmem:[#allocation8 + $0x18] sm:$0xff] %v175
    %242 = vst [vmem:[#allocation8 + $0x20] sm:$0xff] %v180
    %243 = vst [vmem:[#allocation8 + $0x28] sm:$0xff] %v185
    %244 = vst [vmem:[#allocation8 + $0x30] sm:$0xff] %v190
    %245 = vst [vmem:[#allocation8 + $0x38] sm:$0xff] %v195
    %246 = vst [vmem:[#allocation8 + $0x40] sm:$0xff] %v200
    %247 = vst [vmem:[#allocation8 + $0x48] sm:$0xff] %v205
    %248 = vst [vmem:[#allocation8 + $0x50] sm:$0xff] %v210
    %249 = vst [vmem:[#allocation8 + $0x58] sm:$0xff] %v215
    %250 = vst [vmem:[#allocation8 + $0x60] sm:$0xff] %v220
    %251 = vst [vmem:[#allocation8 + $0x68] sm:$0xff] %v225
    %252 = vst [vmem:[#allocation8 + $0x70] sm:$0xff] %v230
    %253 = vst [vmem:[#allocation8 + $0x78] sm:$0xff] %v235
    // Predicated region
    $region26: #{tpu_custom_call.1} parent=1 // pred_check
      _
    $region27: #{tpu_custom_call.1} parent=1 // pred_check_branch
      %255 = sbr.rel (0) target = $region29
    $region28: #{tpu_custom_call.1} parent=1 // pred_region
      %s257 = ssub.s32 2048, 2048
      %258 = vsyncadd [#allocation4], %s257
      %s259 = sshll.u32 [#allocation8], 4
      %s260 = int_to_ptr.vmem [resolvable:$true] %s259
      %265 = dma.vmem_to_hbm [thread:$0]  %s260, 2048, %s3, [#allocation4], 128, 128, 8
    $region29: #{tpu_custom_call.1} parent=1 // pred_fallthru
      _
    // Predicated region
    $region30: #{tpu_custom_call.1} parent=1 // pred_check
      _
    $region31: #{tpu_custom_call.1} parent=1 // pred_check_branch
      %267 = sbr.rel (0) target = $region33
    $region32: #{tpu_custom_call.1} parent=1 // pred_region
      %268 = dma.done [#allocation4], 2048
    $region33: #{tpu_custom_call.1} parent=1 // pred_fallthru
      _
    %269 = vsyncpa [#allocation3], 1
    %270 = vsyncpa [#allocation6], 1
    %271 = vsyncpa [#allocation4], 1

</llo_original>
